<compile_context>
chip_gen: v6e
topology: v6e:2x2x1
jax: 0.10.0
libtpu: 0.0.40
codegen_flags: <defaults>
</compile_context>

<pallas_src>
import functools

import jax
import jax.numpy as jnp
from jax import lax
from jax.experimental import pallas as pl
from jax.experimental.pallas import tpu as pltpu


def _round_up(x, m):
    return (x + m - 1) // m * m


def _ord_label_moco_kernel(x_ref, t_ref, out_ref,
                           m_acc, l_acc, xt_acc, ts_acc,
                           *, n_total, q_total):
    bi = pl.program_id(0)          # batch tile   (parallel)
    ki = pl.program_id(1)          # queue tile   (reduction, last axis)
    nk = pl.num_programs(1)
    tile_n, tile_q = x_ref.shape

    x = x_ref[...].astype(jnp.float32)
    t = t_ref[...].astype(jnp.float32)

    # Validity mask for padded batch rows / queue columns.
    row = lax.broadcasted_iota(jnp.int32, (tile_n, tile_q), 0) + bi * tile_n
    col = lax.broadcasted_iota(jnp.int32, (tile_n, tile_q), 1) + ki * tile_q
    valid = (row < n_total) & (col < q_total)

    neg_inf = jnp.float32(-jnp.inf)
    x_m = jnp.where(valid, x, neg_inf)          # padded -> contributes 0 to exp-sum
    t_m = jnp.where(valid, t, 0.0)              # padded -> contributes 0 to t-sum
    xt_m = jnp.where(valid, x * t, 0.0)         # padded -> contributes 0 to x*t-sum

    @pl.when(ki == 0)
    def _init():
        m_acc[...] = jnp.full_like(m_acc, -jnp.inf)
        l_acc[...] = jnp.zeros_like(l_acc)
        xt_acc[...] = jnp.zeros_like(xt_acc)
        ts_acc[...] = jnp.zeros_like(ts_acc)

    # Online logsumexp over queue tiles (numerically stable, no per-element log).
    m_prev = m_acc[...]                                             # (tile_n, 1)
    m_new = jnp.maximum(m_prev, jnp.max(x_m, axis=1, keepdims=True))
    m_safe = jnp.where(m_new == neg_inf, 0.0, m_new)                # fully-padded rows
    alpha = jnp.where(m_prev == neg_inf, 0.0, jnp.exp(m_prev - m_safe))
    p = jnp.where(valid, jnp.exp(x_m - m_safe), 0.0)
    l_acc[...] = alpha * l_acc[...] + jnp.sum(p, axis=1, keepdims=True)
    m_acc[...] = m_new
    xt_acc[...] += jnp.sum(xt_m, axis=1, keepdims=True)
    ts_acc[...] += jnp.sum(t_m, axis=1, keepdims=True)

    @pl.when(ki == nk - 1)
    def _finalize():
        m = m_acc[...]
        lse = jnp.where(m == neg_inf, 0.0, m) + jnp.log(l_acc[...])
        #  per_row = lse - sum(x*t)/sum(t)
        per_row = lse - xt_acc[...] / ts_acc[...]
        row1 = lax.broadcasted_iota(jnp.int32, per_row.shape, 0) + bi * tile_n
        out_ref[...] = jnp.where(row1 < n_total, per_row, 0.0)


def ord_label_moco_loss(logits, targets, inner=False, *, block_n=None, block_q=None,
                        vmem_limit_bytes=32 * 1024 * 1024):
    """Pallas TPU implementation of OrdLabelMoCoLoss.forward.

    `inner` is accepted for API parity; the reference PyTorch forward does not
    use it, so semantics are identical for both settings.
    """
    assert logits.ndim == 2 and logits.shape == targets.shape
    n, q = logits.shape

    # Sublane multiple depends on input packing (f32: 8, bf16: 16).
    sub = 16 if logits.dtype == jnp.bfloat16 else 8

    if block_n is None:
        block_n = min(256, _round_up(n, sub))
    block_n = _round_up(block_n, sub)

    if block_q is None:
        # ~4 MiB f32 per input tile: with 2 inputs x 2 pipeline buffers this is
        # ~16 MiB of VMEM -> fits v7x (64 MiB physical) and the 32 MiB scoped
        # limit we request below; v5e/v6e have headroom to spare.
        budget_bytes = 4 * 1024 * 1024
        block_q = max(512, budget_bytes // (block_n * 4))
    block_q = _round_up(min(block_q, _round_up(q, 128)), 128)

    n_pad = _round_up(n, block_n)
    q_pad = _round_up(q, block_q)
    if (n_pad, q_pad) != (n, q):
        logits = jnp.pad(logits, ((0, n_pad - n), (0, q_pad - q)))
        targets = jnp.pad(targets, ((0, n_pad - n), (0, q_pad - q)))

    grid = (n_pad // block_n, q_pad // block_q)
    kernel = functools.partial(_ord_label_moco_kernel, n_total=n, q_total=q)

    per_row = pl.pallas_call(
        kernel,
        out_shape=jax.ShapeDtypeStruct((n_pad, 1), jnp.float32),
        grid_spec=pltpu.PrefetchScalarGridSpec(
            num_scalar_prefetch=0,
            grid=grid,
            in_specs=[
                pl.BlockSpec((block_n, block_q), lambda bi, ki: (bi, ki)),
                pl.BlockSpec((block_n, block_q), lambda bi, ki: (bi, ki)),
            ],
            out_specs=pl.BlockSpec((block_n, 1), lambda bi, ki: (bi, 0)),
            scratch_shapes=[pltpu.VMEM((block_n, 1), jnp.float32)] * 4,
        ),
        compiler_params=pltpu.CompilerParams(
            dimension_semantics=("parallel", "arbitrary"),
            vmem_limit_bytes=vmem_limit_bytes,
        ),
    )(logits, targets)

    # Final mean over the (tiny) per-row output in plain XLA.
    return jnp.sum(per_row) / jnp.float32(n)


def _reference(logits, targets):
    # Pure-JAX mirror of the PyTorch module.
    x = logits.astype(jnp.float32)
    t = targets.astype(jnp.float32)
    ex = jnp.exp(x)
    logp = jnp.log(ex / ex.sum(axis=1, keepdims=True))
    per_row = -(logp * t).sum(axis=1) / t.sum(axis=1)
    return per_row.mean()


if __name__ == "__main__":
    key = jax.random.PRNGKey(0)
    k1, k2 = jax.random.split(key)

    # Small N_batch x N_queue shapes; deliberately NOT tile-aligned so the
    # padding/mask path and the (parallel, arbitrary) grid are exercised.
    N, Q = 24, 800
    logits = jax.random.normal(k1, (N, Q), dtype=jnp.float32)
    targets = jax.random.uniform(k2, (N, Q), dtype=jnp.float32)  # nonzero row sums

    # grid = (3, 4): batch tiles x queue (reduction) tiles.
    loss = ord_label_moco_loss(logits, targets, block_n=8, block_q=256)
    jax.block_until_ready(loss)
    ref = _reference(logits, targets)
    assert jnp.allclose(loss, ref, rtol=1e-5, atol=1e-5), (loss, ref)

    # Auto-sized tiles on an aligned shape (single grid step).
    k3, k4 = jax.random.split(k2)
    N2, Q2 = 16, 512
    logits2 = jax.random.normal(k3, (N2, Q2), dtype=jnp.float32)
    targets2 = jax.random.uniform(k4, (N2, Q2), dtype=jnp.float32)
    loss2 = ord_label_moco_loss(logits2, targets2)
    jax.block_until_ready(loss2)
    ref2 = _reference(logits2, targets2)
    assert jnp.allclose(loss2, ref2, rtol=1e-5, atol=1e-5), (loss2, ref2)

    print("KERNEL_OK")
</pallas_src>

<mosaic_0001>
module attributes {stable_mosaic.version = 11 : i64} {
  func.func @_ord_label_moco_kernel(%arg0: i32, %arg1: i32, %arg2: memref<8x256xf32, #tpu.memory_space<vmem>>, %arg3: memref<8x256xf32, #tpu.memory_space<vmem>>, %arg4: memref<8x1xf32, #tpu.memory_space<vmem>>, %arg5: memref<8x1xf32, #tpu.memory_space<vmem>>, %arg6: memref<8x1xf32, #tpu.memory_space<vmem>>, %arg7: memref<8x1xf32, #tpu.memory_space<vmem>>, %arg8: memref<8x1xf32, #tpu.memory_space<vmem>>) attributes {dimension_semantics = [#tpu.dimension_semantics<parallel>, #tpu.dimension_semantics<arbitrary>], iteration_bounds = array<i64: 3, 4>, scalar_prefetch = 0 : i64, scratch_operands = 4 : i64, tpu.core_type = #tpu.core_type<tc>, window_params = [{transform_indices = @transform_0, window_bounds = array<i64: 8, 256>}, {transform_indices = @transform_1, window_bounds = array<i64: 8, 256>}, {transform_indices = @transform_2, window_bounds = array<i64: 8, 1>}]} {
    %c0 = arith.constant 0 : index
    %c0_0 = arith.constant 0 : index
    %0 = vector.load %arg2[%c0, %c0_0] : memref<8x256xf32, #tpu.memory_space<vmem>>, vector<8x256xf32>
    %c0_1 = arith.constant 0 : index
    %c0_2 = arith.constant 0 : index
    %1 = vector.load %arg3[%c0_1, %c0_2] : memref<8x256xf32, #tpu.memory_space<vmem>>, vector<8x256xf32>
    %2 = tpu.iota {dimensions = array<i32: 0>} : vector<8x256xi32>
    %c8_i32 = arith.constant 8 : i32
    %3 = arith.muli %arg0, %c8_i32 : i32
    %4 = vector.broadcast %3 : i32 to vector<8x256xi32>
    %5 = arith.addi %2, %4 : vector<8x256xi32>
    %6 = tpu.iota {dimensions = array<i32: 1>} : vector<8x256xi32>
    %c256_i32 = arith.constant 256 : i32
    %7 = arith.muli %arg1, %c256_i32 : i32
    %8 = vector.broadcast %7 : i32 to vector<8x256xi32>
    %9 = arith.addi %6, %8 : vector<8x256xi32>
    %c24_i32 = arith.constant 24 : i32
    %10 = vector.broadcast %c24_i32 : i32 to vector<8x256xi32>
    %11 = arith.cmpi slt, %5, %10 : vector<8x256xi32>
    %c800_i32 = arith.constant 800 : i32
    %12 = vector.broadcast %c800_i32 : i32 to vector<8x256xi32>
    %13 = arith.cmpi slt, %9, %12 : vector<8x256xi32>
    %14 = arith.andi %11, %13 : vector<8x256xi1>
    %cst = arith.constant 0xFF800000 : f32
    %15 = vector.broadcast %cst : f32 to vector<8x256xf32>
    %16 = arith.select %14, %0, %15 : vector<8x256xi1>, vector<8x256xf32>
    %cst_3 = arith.constant 0.000000e+00 : f32
    %17 = vector.broadcast %cst_3 : f32 to vector<8x256xf32>
    %18 = arith.select %14, %1, %17 : vector<8x256xi1>, vector<8x256xf32>
    %19 = arith.mulf %0, %1 : vector<8x256xf32>
    %cst_4 = arith.constant 0.000000e+00 : f32
    %20 = vector.broadcast %cst_4 : f32 to vector<8x256xf32>
    %21 = arith.select %14, %19, %20 : vector<8x256xi1>, vector<8x256xf32>
    %c0_i32 = arith.constant 0 : i32
    %22 = arith.cmpi eq, %arg1, %c0_i32 : i32
    %23 = arith.extui %22 : i1 to i32
    %c0_i32_5 = arith.constant 0 : i32
    %24 = arith.cmpi ne, %23, %c0_i32_5 : i32
    scf.if %24 {
      %cst_33 = arith.constant 0xFF800000 : f32
      %64 = vector.broadcast %cst_33 : f32 to vector<8x1xf32>
      %c0_34 = arith.constant 0 : index
      %c0_35 = arith.constant 0 : index
      %65 = vector.load %arg5[%c0_34, %c0_35] : memref<8x1xf32, #tpu.memory_space<vmem>>, vector<8x1xf32>
      tpu.vector_store %arg5[%c0_34, %c0_35], %64 {strides = array<i32>} : memref<8x1xf32, #tpu.memory_space<vmem>>, vector<8x1xf32>,
      %cst_36 = arith.constant 0.000000e+00 : f32
      %66 = vector.broadcast %cst_36 : f32 to vector<8x1xf32>
      %c0_37 = arith.constant 0 : index
      %c0_38 = arith.constant 0 : index
      %67 = vector.load %arg6[%c0_37, %c0_38] : memref<8x1xf32, #tpu.memory_space<vmem>>, vector<8x1xf32>
      tpu.vector_store %arg6[%c0_37, %c0_38], %66 {strides = array<i32>} : memref<8x1xf32, #tpu.memory_space<vmem>>, vector<8x1xf32>,
      %cst_39 = arith.constant 0.000000e+00 : f32
      %68 = vector.broadcast %cst_39 : f32 to vector<8x1xf32>
      %c0_40 = arith.constant 0 : index
      %c0_41 = arith.constant 0 : index
      %69 = vector.load %arg7[%c0_40, %c0_41] : memref<8x1xf32, #tpu.memory_space<vmem>>, vector<8x1xf32>
      tpu.vector_store %arg7[%c0_40, %c0_41], %68 {strides = array<i32>} : memref<8x1xf32, #tpu.memory_space<vmem>>, vector<8x1xf32>,
      %cst_42 = arith.constant 0.000000e+00 : f32
      %70 = vector.broadcast %cst_42 : f32 to vector<8x1xf32>
      %c0_43 = arith.constant 0 : index
      %c0_44 = arith.constant 0 : index
      %71 = vector.load %arg8[%c0_43, %c0_44] : memref<8x1xf32, #tpu.memory_space<vmem>>, vector<8x1xf32>
      tpu.vector_store %arg8[%c0_43, %c0_44], %70 {strides = array<i32>} : memref<8x1xf32, #tpu.memory_space<vmem>>, vector<8x1xf32>,
    } else {
    }
    %c0_6 = arith.constant 0 : index
    %c0_7 = arith.constant 0 : index
    %25 = vector.load %arg5[%c0_6, %c0_7] : memref<8x1xf32, #tpu.memory_space<vmem>>, vector<8x1xf32>
    %cst_8 = arith.constant dense<0xFF800000> : vector<8xf32>
    %26 = vector.multi_reduction <maximumf>, %16, %cst_8 [1] : vector<8x256xf32> to vector<8xf32>
    %27 = vector.shape_cast %26 : vector<8xf32> to vector<8x1xf32>
    %28 = arith.maximumf %25, %27 : vector<8x1xf32>
    %cst_9 = arith.constant 0xFF800000 : f32
    %29 = vector.broadcast %cst_9 : f32 to vector<8x1xf32>
    %30 = arith.cmpf oeq, %28, %29 : vector<8x1xf32>
    %cst_10 = arith.constant 0.000000e+00 : f32
    %31 = vector.broadcast %cst_10 : f32 to vector<8x1xf32>
    %32 = arith.select %30, %31, %28 : vector<8x1xi1>, vector<8x1xf32>
    %cst_11 = arith.constant 0xFF800000 : f32
    %33 = vector.broadcast %cst_11 : f32 to vector<8x1xf32>
    %34 = arith.cmpf oeq, %25, %33 : vector<8x1xf32>
    %35 = arith.subf %25, %32 : vector<8x1xf32>
    %36 = math.exp %35 : vector<8x1xf32>
    %cst_12 = arith.constant 0.000000e+00 : f32
    %37 = vector.broadcast %cst_12 : f32 to vector<8x1xf32>
    %38 = arith.select %34, %37, %36 : vector<8x1xi1>, vector<8x1xf32>
    %39 = vector.broadcast %32 : vector<8x1xf32> to vector<8x256xf32>
    %40 = arith.subf %16, %39 : vector<8x256xf32>
    %41 = math.exp %40 : vector<8x256xf32>
    %cst_13 = arith.constant 0.000000e+00 : f32
    %42 = vector.broadcast %cst_13 : f32 to vector<8x256xf32>
    %43 = arith.select %14, %41, %42 : vector<8x256xi1>, vector<8x256xf32>
    %c0_14 = arith.constant 0 : index
    %c0_15 = arith.constant 0 : index
    %44 = vector.load %arg6[%c0_14, %c0_15] : memref<8x1xf32, #tpu.memory_space<vmem>>, vector<8x1xf32>
    %45 = arith.mulf %38, %44 : vector<8x1xf32>
    %cst_16 = arith.constant dense<0.000000e+00> : vector<8xf32>
    %46 = vector.multi_reduction <add>, %43, %cst_16 [1] : vector<8x256xf32> to vector<8xf32>
    %47 = vector.shape_cast %46 : vector<8xf32> to vector<8x1xf32>
    %48 = arith.addf %45, %47 : vector<8x1xf32>
    %c0_17 = arith.constant 0 : index
    %c0_18 = arith.constant 0 : index
    %49 = vector.load %arg6[%c0_17, %c0_18] : memref<8x1xf32, #tpu.memory_space<vmem>>, vector<8x1xf32>
    tpu.vector_store %arg6[%c0_17, %c0_18], %48 {strides = array<i32>} : memref<8x1xf32, #tpu.memory_space<vmem>>, vector<8x1xf32>,
    %c0_19 = arith.constant 0 : index
    %c0_20 = arith.constant 0 : index
    %50 = vector.load %arg5[%c0_19, %c0_20] : memref<8x1xf32, #tpu.memory_space<vmem>>, vector<8x1xf32>
    tpu.vector_store %arg5[%c0_19, %c0_20], %28 {strides = array<i32>} : memref<8x1xf32, #tpu.memory_space<vmem>>, vector<8x1xf32>,
    %c0_21 = arith.constant 0 : index
    %c0_22 = arith.constant 0 : index
    %51 = vector.load %arg7[%c0_21, %c0_22] : memref<8x1xf32, #tpu.memory_space<vmem>>, vector<8x1xf32>
    %cst_23 = arith.constant dense<0.000000e+00> : vector<8xf32>
    %52 = vector.multi_reduction <add>, %21, %cst_23 [1] : vector<8x256xf32> to vector<8xf32>
    %53 = vector.shape_cast %52 : vector<8xf32> to vector<8x1xf32>
    %54 = arith.addf %51, %53 : vector<8x1xf32>
    %c0_24 = arith.constant 0 : index
    %c0_25 = arith.constant 0 : index
    %55 = vector.load %arg7[%c0_24, %c0_25] : memref<8x1xf32, #tpu.memory_space<vmem>>, vector<8x1xf32>
    tpu.vector_store %arg7[%c0_24, %c0_25], %54 {strides = array<i32>} : memref<8x1xf32, #tpu.memory_space<vmem>>, vector<8x1xf32>,
    %c0_26 = arith.constant 0 : index
    %c0_27 = arith.constant 0 : index
    %56 = vector.load %arg8[%c0_26, %c0_27] : memref<8x1xf32, #tpu.memory_space<vmem>>, vector<8x1xf32>
    %cst_28 = arith.constant dense<0.000000e+00> : vector<8xf32>
    %57 = vector.multi_reduction <add>, %18, %cst_28 [1] : vector<8x256xf32> to vector<8xf32>
    %58 = vector.shape_cast %57 : vector<8xf32> to vector<8x1xf32>
    %59 = arith.addf %56, %58 : vector<8x1xf32>
    %c0_29 = arith.constant 0 : index
    %c0_30 = arith.constant 0 : index
    %60 = vector.load %arg8[%c0_29, %c0_30] : memref<8x1xf32, #tpu.memory_space<vmem>>, vector<8x1xf32>
    tpu.vector_store %arg8[%c0_29, %c0_30], %59 {strides = array<i32>} : memref<8x1xf32, #tpu.memory_space<vmem>>, vector<8x1xf32>,
    %c3_i32 = arith.constant 3 : i32
    %61 = arith.cmpi eq, %arg1, %c3_i32 : i32
    %62 = arith.extui %61 : i1 to i32
    %cst_31 = arith.constant 0xFF800000 : f32
    %c0_i32_32 = arith.constant 0 : i32
    %63 = arith.cmpi ne, %62, %c0_i32_32 : i32
    scf.if %63 {
      %c0_33 = arith.constant 0 : index
      %c0_34 = arith.constant 0 : index
      %64 = vector.load %arg5[%c0_33, %c0_34] : memref<8x1xf32, #tpu.memory_space<vmem>>, vector<8x1xf32>
      %65 = vector.broadcast %cst_31 : f32 to vector<8x1xf32>
      %66 = arith.cmpf oeq, %64, %65 : vector<8x1xf32>
      %cst_35 = arith.constant 0.000000e+00 : f32
      %67 = vector.broadcast %cst_35 : f32 to vector<8x1xf32>
      %68 = arith.select %66, %67, %64 : vector<8x1xi1>, vector<8x1xf32>
      %c0_36 = arith.constant 0 : index
      %c0_37 = arith.constant 0 : index
      %69 = vector.load %arg6[%c0_36, %c0_37] : memref<8x1xf32, #tpu.memory_space<vmem>>, vector<8x1xf32>
      %70 = math.log %69 : vector<8x1xf32>
      %71 = arith.addf %68, %70 : vector<8x1xf32>
      %c0_38 = arith.constant 0 : index
      %c0_39 = arith.constant 0 : index
      %72 = vector.load %arg7[%c0_38, %c0_39] : memref<8x1xf32, #tpu.memory_space<vmem>>, vector<8x1xf32>
      %c0_40 = arith.constant 0 : index
      %c0_41 = arith.constant 0 : index
      %73 = vector.load %arg8[%c0_40, %c0_41] : memref<8x1xf32, #tpu.memory_space<vmem>>, vector<8x1xf32>
      %74 = arith.divf %72, %73 : vector<8x1xf32>
      %75 = arith.subf %71, %74 : vector<8x1xf32>
      %76 = tpu.iota {dimensions = array<i32: 0>} : vector<8x1xi32>
      %c8_i32_42 = arith.constant 8 : i32
      %77 = arith.muli %arg0, %c8_i32_42 : i32
      %78 = vector.broadcast %77 : i32 to vector<8x1xi32>
      %79 = arith.addi %76, %78 : vector<8x1xi32>
      %c24_i32_43 = arith.constant 24 : i32
      %80 = vector.broadcast %c24_i32_43 : i32 to vector<8x1xi32>
      %81 = arith.cmpi slt, %79, %80 : vector<8x1xi32>
      %cst_44 = arith.constant 0.000000e+00 : f32
      %82 = vector.broadcast %cst_44 : f32 to vector<8x1xf32>
      %83 = arith.select %81, %75, %82 : vector<8x1xi1>, vector<8x1xf32>
      %c0_45 = arith.constant 0 : index
      %c0_46 = arith.constant 0 : index
      %84 = vector.load %arg4[%c0_45, %c0_46] : memref<8x1xf32, #tpu.memory_space<vmem>>, vector<8x1xf32>
      tpu.vector_store %arg4[%c0_45, %c0_46], %83 {strides = array<i32>} : memref<8x1xf32, #tpu.memory_space<vmem>>, vector<8x1xf32>,
    } else {
    }
    return
  }
  func.func @transform_0(%arg0: i32, %arg1: i32) -> (i32, i32) {
    %c0_i32 = arith.constant 0 : i32
    return %arg0, %arg1 : i32, i32
  }
  func.func @transform_1(%arg0: i32, %arg1: i32) -> (i32, i32) {
    %c0_i32 = arith.constant 0 : i32
    return %arg0, %arg1 : i32, i32
  }
  func.func @transform_2(%arg0: i32, %arg1: i32) -> (i32, i32) {
    %c0_i32 = arith.constant 0 : i32
    %c0_i32_0 = arith.constant 0 : i32
    return %arg0, %c0_i32 : i32, i32
  }
}

</mosaic_0001>

<llo_original>
// kernel: tpu_custom_call.1
$region0: #{tpu_custom_call.1}
  #allocation0 [shape = 'u32[]', space=smem, size = 0x4, offset = 0x4, fixed_abs, tag = 'smem constant byte address 0x4 - core index']
  #allocation1 [shape = 'u32[144,128]{1,0:T(1,128)}', space=vmem, size = 0x12000, scoped, tag = 'internal scratch']
  #allocation2 [shape = 'f32[8,1]{1,0:T(8,128)}', space=vmem, size = 0x1000, scoped, tag = 'scratch operand']
  #allocation3 [shape = 'f32[8,1]{1,0:T(8,128)}', space=vmem, size = 0x1000, scoped, tag = 'scratch operand']
  #allocation4 [shape = 'f32[8,1]{1,0:T(8,128)}', space=vmem, size = 0x1000, scoped, tag = 'scratch operand']
  #allocation5 [shape = 'f32[8,1]{1,0:T(8,128)}', space=vmem, size = 0x1000, scoped, tag = 'scratch operand']
  %s0 = inlined_call_operand.hbm [shape: f32[24,1024], index: 0, kind: input, shape index: {}]
  %s1 = inlined_call_operand.hbm [shape: f32[24,1024], index: 1, kind: input, shape index: {}]
  %s2 = inlined_call_operand.vmem [shape: f32[24,1], index: 2, kind: output, shape index: {}]
  %s3 = sld [smem:[#allocation0]]
  $region57: #{tpu_custom_call.1} parent=0
    _
  %s5 = ssub.s32 1, %s3
  %s6 = scalar_select 0, %s5, %s3
  $region1: #{tpu_custom_call.1} parent=0
    #allocation6 [shape = 'u8[16384]{0}', space=vmem, size = 0x4000, scoped, tag = 'input window, operand 0']
    #allocation7 [shape = 's32[2]{0}', space=sflag, size = 0x8, scoped, tag = 'scoped memory for tpu_custom_call.1']
    #allocation8 [shape = 'u8[16384]{0}', space=vmem, size = 0x4000, scoped, tag = 'input window, operand 1']
    #allocation9 [shape = 's32[2]{0}', space=sflag, size = 0x8, scoped, tag = 'scoped memory for tpu_custom_call.1']
    %7 = vsyncpa [#allocation7], 0
    %s8 = scalar_lea.sflag [#allocation7], 1
    %9 = vsyncpa %s8, 0
    %10 = vsyncpa [#allocation9], 0
    %s11 = scalar_lea.sflag [#allocation9], 1
    %12 = vsyncpa %s11, 0
    loop: start=0, step=1, limit=14
    $region2: #{tpu_custom_call.1} parent=1 // loop_pre_header
      _
    $region3: #{tpu_custom_call.1} parent=1 // loop_header
      %s14 = sphi 0, %s18
      %p15 = scmp.ge.s32.totalorder %s14, 14
      %s21 = sphi 0, %s33
      %s22 = sphi 0, %s29
      %s23 = sphi 0, %s21
      %s24 = sphi 0, %s22
      %s25 = sphi 0, %s23
      %s26 = sphi 0, %s24
      %s38 = sphi 0, %s40
      %s41 = sphi 0, %s38
      %s42 = sphi 0, %s41
      %s58 = sphi 0, %s42
      %s66 = sphi 0, %s68
      %s69 = sphi 0, %s66
      %s70 = sphi 0, %s69
      %s86 = sphi 0, %s70
      %s92 = sphi 0, %s94
      %s95 = sphi 0, %s92
      %s96 = sphi 0, %s95
      %s112 = sphi 0, %s96
    $region4: #{tpu_custom_call.1} parent=1 // loop_header_branch
      %17 = sbr.rel (%p15) target = $region8
    $region5: #{tpu_custom_call.1} parent=1 // loop_body
      %s19 = ssub.s32 %s14, 1
      %s20 = ssub.s32 %s14, 2
      %s27 = sadd.s32 1, %s22
      %p28 = scmp.ge.s32.totalorder %s27, 4
      %s29 = scalar_select %p28, 0, %s27
      %s30 = sadd.s32 1, %s21
      %s31 = scalar_select %p28, %s30, %s21
      %p32 = scmp.ge.s32.totalorder %s31, 3
      %s33 = scalar_select %p32, 0, %s31
      %s34 = ssub.s32 %s21, %s33
      %s35 = ssub.s32 %s22, %s29
      %s36 = sor.u32 %s34, %s35
      %p37 = scmp.eq.s32.totalorder %s36, 0
      %s39 = sadd.s32 %s38, 1
      %s40 = scalar_select %p37, %s38, %s39
      %p43 = pneg %p37
      %p44 = scmp.eq.s32.totalorder %s14, 11
      %p45 = por %p43, %p44
      %p46 = scmp.ne.s32.totalorder %s38, %s41
      %p47 = scmp.eq.s32.totalorder %s14, 0
      %p48 = por %p46, %p47
      %p49 = scmp.ne.s32.totalorder %s38, %s41
      %p50 = scmp.eq.s32.totalorder %s19, 11
      %p51 = por %p49, %p50
      %p52 = scmp.ne.s32.totalorder %s41, %s42
      %p53 = scmp.eq.s32.totalorder %s19, 0
      %p54 = por %p52, %p53
      %p55 = scmp.ne.s32.totalorder %s41, %s42
      %p56 = scmp.eq.s32.totalorder %s20, 11
      %p57 = por %p55, %p56
      %p59 = scmp.ne.s32.totalorder %s42, %s58
      %p60 = scmp.eq.s32.totalorder %s20, 0
      %p61 = por %p59, %p60
      %s62 = ssub.s32 %s21, %s33
      %s63 = ssub.s32 %s22, %s29
      %s64 = sor.u32 %s62, %s63
      %p65 = scmp.eq.s32.totalorder %s64, 0
      %s67 = sadd.s32 %s66, 1
      %s68 = scalar_select %p65, %s66, %s67
      %p71 = pneg %p65
      %p72 = scmp.eq.s32.totalorder %s14, 11
      %p73 = por %p71, %p72
      %p74 = scmp.ne.s32.totalorder %s66, %s69
      %p75 = scmp.eq.s32.totalorder %s14, 0
      %p76 = por %p74, %p75
      %p77 = scmp.ne.s32.totalorder %s66, %s69
      %p78 = scmp.eq.s32.totalorder %s19, 11
      %p79 = por %p77, %p78
      %p80 = scmp.ne.s32.totalorder %s69, %s70
      %p81 = scmp.eq.s32.totalorder %s19, 0
      %p82 = por %p80, %p81
      %p83 = scmp.ne.s32.totalorder %s69, %s70
      %p84 = scmp.eq.s32.totalorder %s20, 11
      %p85 = por %p83, %p84
      %p87 = scmp.ne.s32.totalorder %s70, %s86
      %p88 = scmp.eq.s32.totalorder %s20, 0
      %p89 = por %p87, %p88
      %s90 = ssub.s32 %s21, %s33
      %p91 = scmp.eq.s32.totalorder %s90, 0
      %s93 = sadd.s32 %s92, 1
      %s94 = scalar_select %p91, %s92, %s93
      %p97 = pneg %p91
      %p98 = scmp.eq.s32.totalorder %s14, 11
      %p99 = por %p97, %p98
      %p100 = scmp.ne.s32.totalorder %s92, %s95
      %p101 = scmp.eq.s32.totalorder %s14, 0
      %p102 = por %p100, %p101
      %p103 = scmp.ne.s32.totalorder %s92, %s95
      %p104 = scmp.eq.s32.totalorder %s19, 11
      %p105 = por %p103, %p104
      %p106 = scmp.ne.s32.totalorder %s95, %s96
      %p107 = scmp.eq.s32.totalorder %s19, 0
      %p108 = por %p106, %p107
      %p109 = scmp.ne.s32.totalorder %s95, %s96
      %p110 = scmp.eq.s32.totalorder %s20, 11
      %p111 = por %p109, %p110
      %p113 = scmp.ne.s32.totalorder %s96, %s112
      %p114 = scmp.eq.s32.totalorder %s20, 0
      %p115 = por %p113, %p114
      %p116 = scmp.le.s32.totalorder 1, %s14
      %p117 = scmp.lt.s32.totalorder %s14, 13
      %p118 = pnand %p116, %p117
      %p119 = pneg %p118
      // Predicated region
      $region9: #{tpu_custom_call.1} parent=5 // pred_check
        _
      $region10: #{tpu_custom_call.1} parent=5 // pred_check_branch
        %121 = sbr.rel (%p118) target = $region12
      $region11: #{tpu_custom_call.1} parent=5 // pred_region
        %s122 = ssub.s32 %s14, 1
      $region12: #{tpu_custom_call.1} parent=5 // pred_fallthru
        _
      %p123 = scmp.lt.s32.totalorder %s14, 12
      // Predicated region
      $region13: #{tpu_custom_call.1} parent=5 // pred_check
        %p124 = pneg %p123
      $region14: #{tpu_custom_call.1} parent=5 // pred_check_branch
        %126 = sbr.rel (%p124) target = $region16
      $region15: #{tpu_custom_call.1} parent=5 // pred_region
        // Predicated region
        $region17: #{tpu_custom_call.1} parent=15 // pred_check
          %p127 = pneg %p48
        $region18: #{tpu_custom_call.1} parent=15 // pred_check_branch
          %129 = sbr.rel (%p127) target = $region20
        $region19: #{tpu_custom_call.1} parent=15 // pred_region
          %s130 = sand.u32 %s38, 1
          %s131 = scalar_lea.sflag [#allocation7], %s130
          %s132 = sand.u32 %s38, 1
          %s133 = smul.addr %s132, 16
          %s134 = scalar_lea.vmem [#allocation6], %s133
          %s135 = smul.u32 2, %s22
          %s137 = ssub.s32 256, 256
          %138 = vsyncadd %s131, %s137
          %s139 = smul.addr %s21, 8
          %s140 = sadd.s32 %s135, %s139
          %s141 = smul.addr %s140, 128
          %s142 = scalar_lea.hbm %s0, %s141
          %s144 = sshll.u32 %s134, 4
          %s145 = int_to_ptr.vmem [resolvable:$true] %s144
          %147 = dma.hbm_to_vmem [thread:$0]  %s142, 256, %s145, %s131
        $region20: #{tpu_custom_call.1} parent=15 // pred_fallthru
          _
        // Predicated region
        $region21: #{tpu_custom_call.1} parent=15 // pred_check
          %p148 = pneg %p76
        $region22: #{tpu_custom_call.1} parent=15 // pred_check_branch
          %150 = sbr.rel (%p148) target = $region24
        $region23: #{tpu_custom_call.1} parent=15 // pred_region
          %s151 = sand.u32 %s66, 1
          %s152 = scalar_lea.sflag [#allocation9], %s151
          %s153 = sand.u32 %s66, 1
          %s154 = smul.addr %s153, 16
          %s155 = scalar_lea.vmem [#allocation8], %s154
          %s156 = smul.u32 2, %s22
          %s158 = ssub.s32 256, 256
          %159 = vsyncadd %s152, %s158
          %s160 = smul.addr %s21, 8
          %s161 = sadd.s32 %s156, %s160
          %s162 = smul.addr %s161, 128
          %s163 = scalar_lea.hbm %s1, %s162
          %s165 = sshll.u32 %s155, 4
          %s166 = int_to_ptr.vmem [resolvable:$true] %s165
          %168 = dma.hbm_to_vmem [thread:$0]  %s163, 256, %s166, %s152
        $region24: #{tpu_custom_call.1} parent=15 // pred_fallthru
          _
      $region16: #{tpu_custom_call.1} parent=5 // pred_fallthru
        _
      %p169 = scmp.le.s32.totalorder 1, %s14
      %p170 = scmp.lt.s32.totalorder %s14, 13
      %p171 = pnand %p169, %p170
      %p172 = pneg %p171
      // Predicated region
      $region25: #{tpu_custom_call.1} parent=5 // pred_check
        _
      $region26: #{tpu_custom_call.1} parent=5 // pred_check_branch
        %174 = sbr.rel (%p171) target = $region28
      $region27: #{tpu_custom_call.1} parent=5 // pred_region
        %s175 = ssub.s32 %s14, 1
        %s176 = sand.u32 %s41, 1
        %s177 = scalar_lea.sflag [#allocation7], %s176
        %s178 = sand.u32 %s41, 1
        %s179 = smul.addr %s178, 16
        %s180 = scalar_lea.vmem [#allocation6], %s179
        // Predicated region
        $region29: #{tpu_custom_call.1} parent=27 // pred_check
          %p181 = pneg %p54
        $region30: #{tpu_custom_call.1} parent=27 // pred_check_branch
          %183 = sbr.rel (%p181) target = $region32
        $region31: #{tpu_custom_call.1} parent=27 // pred_region
          %184 = dma.done %s177, 256
        $region32: #{tpu_custom_call.1} parent=27 // pred_fallthru
          _
        %s185 = sand.u32 %s69, 1
        %s186 = scalar_lea.sflag [#allocation9], %s185
        %s187 = sand.u32 %s69, 1
        %s188 = smul.addr %s187, 16
        %s189 = scalar_lea.vmem [#allocation8], %s188
        // Predicated region
        $region33: #{tpu_custom_call.1} parent=27 // pred_check
          %p190 = pneg %p82
        $region34: #{tpu_custom_call.1} parent=27 // pred_check_branch
          %192 = sbr.rel (%p190) target = $region36
        $region35: #{tpu_custom_call.1} parent=27 // pred_region
          %193 = dma.done %s186, 256
        $region36: #{tpu_custom_call.1} parent=27 // pred_fallthru
          _
        %s194 = sand.u32 %s41, 1
        %s195 = scalar_lea.sflag [#allocation7], %s194
        %s196 = sand.u32 %s41, 1
        %s197 = smul.addr %s196, 16
        %s198 = scalar_lea.vmem [#allocation6], %s197
        %p199 = pneg %p54
        %p200 = pneg %p51
        %s201 = sand.u32 %s69, 1
        %s202 = scalar_lea.sflag [#allocation9], %s201
        %s203 = sand.u32 %s69, 1
        %s204 = smul.addr %s203, 16
        %s205 = scalar_lea.vmem [#allocation8], %s204
        %p206 = pneg %p82
        %p207 = pneg %p79
        %p208 = pneg %p108
        %p209 = pneg %p105
        %p210 = scmp.lt.s32.totalorder %s23, 2
        %s211 = scalar_select %p210, %s23, 2
        %s212 = smul.addr %s211, 8
        %s213 = scalar_lea.vmem %s2, %s212
        %s214 = smul.u32 2, %s24
        %s215 = smul.u32 2, %s24
        %p216 = scmp.lt.s32.totalorder %s23, 2
        %s217 = scalar_select %p216, %s23, 2
        %s218 = smul.addr %s217, 8
        %s219 = scalar_lea.vmem %s2, %s218
        %v220 = vld [vmem:[%s180] sm:$0xff]
        %v221 = vld [vmem:[%s180 + $0x8] sm:$0xff]
        %v222 = vld [vmem:[%s189] sm:$0xff]
        %v223 = vld [vmem:[%s189 + $0x8] sm:$0xff]
        %v224 = vlaneseq
        %v225 = vshrl.u32 %v224, 7
        %s226 = smul.u32 %s23, 8
        %v227 = vstv %s226
        %v228 = vadd.s32 %v225, %v227
        %v229 = vlaneseq
        %v230 = vand.u32 %v229, 127
        %v231 = vadd.s32 %v230, 128
        %s232 = smul.u32 %s24, 256
        %v233 = vstv %s232
        %v234 = vadd.s32 %v230, %v233
        %v235 = vadd.s32 %v231, %v233
        %vm236 = vcmp.lt.s32.totalorder %v228, 24
        %vm237 = vcmp.lt.s32.totalorder %v234, 800
        %vm238 = vcmp.lt.s32.totalorder %v235, 800
        %vm239 = vmand %vm236, %vm237
        %vm240 = vmand %vm236, %vm238
        %v241 = vsel %vm239, %v220, -inf
        %v242 = vsel %vm240, %v221, -inf
        %v243 = vsel %vm239, %v222, 0.0
        %v244 = vsel %vm240, %v223, 0.0
        %v245 = vmul.f32 %v220, %v222
        %v246 = vmul.f32 %v221, %v223
        %v247 = vsel %vm239, %v245, 0.0
        %v248 = vsel %vm240, %v246, 0.0
        %p249 = scmp.eq.s32.totalorder %s24, 0
        // Predicated region
        $region37: #{tpu_custom_call.1} parent=27 // pred_check
          %p250 = pneg %p249
        $region38: #{tpu_custom_call.1} parent=27 // pred_check_branch
          %252 = sbr.rel (%p250) target = $region40
        $region39: #{tpu_custom_call.1} parent=27 // pred_region
          %vm253 = vcmask 7168
          %254 = vst.msk [vmem:[#allocation2] sm:$0xff] %vm253, -inf
          %255 = vst.msk [vmem:[#allocation3] sm:$0xff] %vm253, 0.0
          %256 = vst.msk [vmem:[#allocation4] sm:$0xff] %vm253, 0.0
          %257 = vst.msk [vmem:[#allocation5] sm:$0xff] %vm253, 0.0
        $region40: #{tpu_custom_call.1} parent=27 // pred_fallthru
          _
        %v258 = vld [vmem:[#allocation2] sm:$0xff]
        %v259 = vmax.f32 %v241, %v242
        %260 = vmax.xlane.f32.xlu0 %v259
        %v261 = vpop.xlane.xlu0 %260
        %v262 = vmax.f32 %v258, %v261
        %vm263 = vcmp.eq.f32.partialorder %v262, -inf
        %v264 = vsel %vm263, 0.0, %v262
        %vm265 = vcmp.eq.f32.partialorder %v258, -inf
        %v266 = vsub.f32 %v258, %v264
        %v267 = vmul.f32 %v266, 1.442695
        %v268 = vpow.pop %v267
        %v269 = vsel %vm265, 0.0, %v268
        %271 = vset.pattern.permute.xlu0 0
        %272 = vperm.xlu0 %271, %v264
        %v273 = vpop.permute.xlu0 %272
        %v275 = vsub.f32 %v241, %v273
        %v276 = vsub.f32 %v242, %v273
        %v277 = vmul.f32 %v275, 1.442695
        %v278 = vpow.pop %v277
        %v279 = vmul.f32 %v276, 1.442695
        %v280 = vpow.pop %v279
        %v281 = vsel %vm239, %v278, 0.0
        %v282 = vsel %vm240, %v280, 0.0
        %v283 = vld [vmem:[#allocation3] sm:$0xff]
        %v284 = vmul.f32 %v269, %v283
        %v285 = vadd.f32 %v281, %v282
        %286 = vadd.xlane.f32.xlu0 %v285
        %v287 = vpop.xlane.xlu0 %286
        %v288 = vadd.f32 %v284, %v287
        %vm289 = vcmask 7168
        %290 = vst.msk [vmem:[#allocation3] sm:$0xff] %vm289, %v288
        %291 = vst.msk [vmem:[#allocation2] sm:$0xff] %vm289, %v262
        %v292 = vld [vmem:[#allocation4] sm:$0xff]
        %v293 = vadd.f32 %v247, %v248
        %294 = vadd.xlane.f32.xlu0 %v293
        %v295 = vpop.xlane.xlu0 %294
        %v296 = vadd.f32 %v292, %v295
        %297 = vst.msk [vmem:[#allocation4] sm:$0xff] %vm289, %v296
        %v298 = vld [vmem:[#allocation5] sm:$0xff]
        %v299 = vadd.f32 %v243, %v244
        %300 = vadd.xlane.f32.xlu0 %v299
        %v301 = vpop.xlane.xlu0 %300
        %v302 = vadd.f32 %v298, %v301
        %303 = vst.msk [vmem:[#allocation5] sm:$0xff] %vm289, %v302
        %p304 = scmp.eq.s32.totalorder %s24, 3
        // Predicated region
        $region41: #{tpu_custom_call.1} parent=27 // pred_check
          %p305 = pneg %p304
        $region42: #{tpu_custom_call.1} parent=27 // pred_check_branch
          %307 = sbr.rel (%p305) target = $region44
        $region43: #{tpu_custom_call.1} parent=27 // pred_region
          %v308 = vld [vmem:[#allocation2] sm:$0xff]
          %vm309 = vcmp.eq.f32.partialorder %v308, -inf
          %v310 = vsel %vm309, 0.0, %v308
          %v311 = vld [vmem:[#allocation3] sm:$0xff]
          %v312 = vlog2.pop %v311
          %v313 = vmul.f32 %v312, 0.6931472
          %v314 = vadd.f32 %v310, %v313
          %v315 = vld [vmem:[#allocation4] sm:$0xff]
          %v316 = vld [vmem:[#allocation5] sm:$0xff]
          %v317 = vrcp.pop %v316
          %v318 = vmul.f32 %v315, %v317
          %v319 = vsub.f32 %v314, %v318
          %v320 = vsel %vm236, %v319, 0.0
          %321 = vst.msk [vmem:[%s219] sm:$0xff] %vm289, %v320
        $region44: #{tpu_custom_call.1} parent=27 // pred_fallthru
          _
        %p322 = scmp.lt.s32.totalorder %s23, 2
        %s323 = scalar_select %p322, %s23, 2
        %s324 = smul.addr %s323, 8
        %s325 = scalar_lea.vmem %s2, %s324
        // Predicated region
        $region45: #{tpu_custom_call.1} parent=27 // pred_check
          %p326 = pneg %p105
        $region46: #{tpu_custom_call.1} parent=27 // pred_check_branch
          %328 = sbr.rel (%p326) target = $region48
        $region47: #{tpu_custom_call.1} parent=27 // pred_region
          _
        $region48: #{tpu_custom_call.1} parent=27 // pred_fallthru
          _
      $region28: #{tpu_custom_call.1} parent=5 // pred_fallthru
        _
      %p329 = scmp.le.s32.totalorder 2, %s14
      // Predicated region
      $region49: #{tpu_custom_call.1} parent=5 // pred_check
        %p330 = pneg %p329
      $region50: #{tpu_custom_call.1} parent=5 // pred_check_branch
        %332 = sbr.rel (%p330) target = $region52
      $region51: #{tpu_custom_call.1} parent=5 // pred_region
        %s333 = ssub.s32 %s14, 2
        // Predicated region
        $region53: #{tpu_custom_call.1} parent=51 // pred_check
          %p334 = pneg %p111
        $region54: #{tpu_custom_call.1} parent=51 // pred_check_branch
          %336 = sbr.rel (%p334) target = $region56
        $region55: #{tpu_custom_call.1} parent=51 // pred_region
          %p337 = scmp.lt.s32.totalorder %s25, 2
          %s338 = scalar_select %p337, %s25, 2
          %s339 = smul.addr %s338, 8
          %s340 = scalar_lea.vmem %s2, %s339
        $region56: #{tpu_custom_call.1} parent=51 // pred_fallthru
          _
      $region52: #{tpu_custom_call.1} parent=5 // pred_fallthru
        _
    $region6: #{tpu_custom_call.1} parent=1 // loop_footer
      %s18 = sadd.s32 1, %s14
    $region7: #{tpu_custom_call.1} parent=1 // loop_footer_branch
      %13 = sbr.rel target = $region3
    $region8: #{tpu_custom_call.1} parent=1 // loop_exit
      _
    %341 = vsyncpa [#allocation7], 1
    %s342 = scalar_lea.sflag [#allocation7], 1
    %343 = vsyncpa %s342, 1
    %344 = vsyncpa [#allocation9], 1
    %s345 = scalar_lea.sflag [#allocation9], 1
    %346 = vsyncpa %s345, 1

</llo_original>
